<compile_context>
chip_gen: v5e
topology: v5e:2x2
jax: 0.10.0
libtpu: 0.0.40
codegen_flags: <defaults>
</compile_context>

<pallas_src>
import jax
import jax.numpy as jnp
from jax import lax
from jax.experimental import pallas as pl
from jax.experimental.pallas import tpu as pltpu


def _round_up(x, m):
    return ((x + m - 1) // m) * m


# ---------------- Pass 1: conv (im2col matmul) + ReLU + per-channel sum / sumsq ----------------

def _conv_relu_stats_kernel(a_ref, w_ref, y_ref, sum_ref, ssq_ref):
    # a_ref:   (TM, Kp)  bf16 im2col tile
    # w_ref:   (Kp, Cp)  bf16 flattened conv weight (replicated block)
    # y_ref:   (TM, Cp)  f32 pre-BN activation (conv + ReLU)
    # sum_ref: (1, Cp)   f32 per-channel running sum     (resident accumulator)
    # ssq_ref: (1, Cp)   f32 per-channel running sum-sq  (resident accumulator)
    @pl.when(pl.program_id(0) == 0)
    def _():
        sum_ref[...] = jnp.zeros_like(sum_ref)
        ssq_ref[...] = jnp.zeros_like(ssq_ref)

    y = jnp.dot(a_ref[...], w_ref[...], preferred_element_type=jnp.float32)
    y = jnp.maximum(y, 0.0)
    y_ref[...] = y

    sum_ref[...] += jnp.sum(y, axis=0, keepdims=True)
    ssq_ref[...] += jnp.sum(y * y, axis=0, keepdims=True)


# ---------------- Pass 2: apply folded BatchNorm (y * scale + shift) ----------------

def _normalize_kernel(y_ref, scale_ref, shift_ref, o_ref):
    o_ref[...] = (y_ref[...] * scale_ref[...] + shift_ref[...]).astype(o_ref.dtype)


def encoder_block_forward(x, weight, gamma, beta, *, stride=2, pad=2, eps=1e-5):
    """x: (N, C_in, H, W) NCHW. weight: (C_out, C_in, 5, 5). Returns NCHW."""
    N, C_in, H, W = x.shape
    C_out, _, KH, KW = weight.shape
    Ho = (H + 2 * pad - KH) // stride + 1
    Wo = (W + 2 * pad - KW) // stride + 1
    M = N * Ho * Wo
    K = C_in * KH * KW

    # Lane / MXU aligned padded sizes.
    Cp = _round_up(C_out, 128)
    Kp = _round_up(K, 128)
    TM = min(512, _round_up(M, 8))       # row tile (pipelined over grid)
    Mp = _round_up(M, TM)
    n_tiles = Mp // TM

    # --- glue: im2col patch extraction (plain JAX) ---
    # TODO(synk): fuse im2col in-kernel (DMA row-bands of x with memory_space=pl.ANY and
    # build the 5x5 patches with static slices) to avoid the ~25x HBM blow-up.
    xp = jnp.pad(x, ((0, 0), (0, 0), (pad, pad), (pad, pad)))
    cols = []
    for kh in range(KH):
        for kw in range(KW):
            cols.append(
                xp[:, :,
                   kh: kh + stride * (Ho - 1) + 1: stride,
                   kw: kw + stride * (Wo - 1) + 1: stride]
            )
    # (KH, KW, N, C_in, Ho, Wo) -> (N, Ho, Wo, C_in, KH, KW)
    patches = jnp.stack(cols, axis=0).reshape(KH, KW, N, C_in, Ho, Wo)
    patches = patches.transpose(2, 4, 5, 3, 0, 1)
    A = patches.reshape(M, K).astype(jnp.bfloat16)
    # Zero padding: padded rows give relu(0@W)=0 -> contribute 0 to BN sums;
    # padded K columns multiply zero weight rows -> no effect on the matmul.
    A = jnp.pad(A, ((0, Mp - M), (0, Kp - K)))

    Wmat = weight.reshape(C_out, K).T.astype(jnp.bfloat16)
    Wmat = jnp.pad(Wmat, ((0, Kp - K), (0, Cp - C_out)))

    # ---- Pass 1: conv + relu + stats ----
    y_pre, s, ssq = pl.pallas_call(
        _conv_relu_stats_kernel,
        out_shape=(
            jax.ShapeDtypeStruct((Mp, Cp), jnp.float32),
            jax.ShapeDtypeStruct((1, Cp), jnp.float32),
            jax.ShapeDtypeStruct((1, Cp), jnp.float32),
        ),
        grid=(n_tiles,),
        in_specs=[
            pl.BlockSpec((TM, Kp), lambda i: (i, 0)),
            pl.BlockSpec((Kp, Cp), lambda i: (0, 0)),
        ],
        out_specs=(
            pl.BlockSpec((TM, Cp), lambda i: (i, 0)),
            pl.BlockSpec((1, Cp), lambda i: (0, 0)),
            pl.BlockSpec((1, Cp), lambda i: (0, 0)),
        ),
        compiler_params=pltpu.CompilerParams(
            dimension_semantics=("arbitrary",),   # accumulators -> sequential
            vmem_limit_bytes=48 << 20),
    )(A, Wmat)

    # ---- tiny (1, Cp) glue: fold BN stats into per-channel scale/shift ----
    g = jnp.pad(gamma.astype(jnp.float32), (0, Cp - C_out)).reshape(1, Cp)
    b = jnp.pad(beta.astype(jnp.float32), (0, Cp - C_out)).reshape(1, Cp)
    inv_m = 1.0 / float(M)                      # true M (padded rows contribute zero)
    mean = s * inv_m
    var = jnp.maximum(ssq * inv_m - mean * mean, 0.0)
    inv_std = lax.rsqrt(var + eps)
    scale = g * inv_std
    shift = b - mean * scale

    # ---- Pass 2: normalize (parallel over M -> both TCs on v7x) ----
    out = pl.pallas_call(
        _normalize_kernel,
        out_shape=jax.ShapeDtypeStruct((Mp, Cp), jnp.float32),
        grid=(n_tiles,),
        in_specs=[
            pl.BlockSpec((TM, Cp), lambda i: (i, 0)),
            pl.BlockSpec((1, Cp), lambda i: (0, 0)),
            pl.BlockSpec((1, Cp), lambda i: (0, 0)),
        ],
        out_specs=pl.BlockSpec((TM, Cp), lambda i: (i, 0)),
        compiler_params=pltpu.CompilerParams(
            dimension_semantics=("parallel",),
            vmem_limit_bytes=48 << 20),
    )(y_pre, scale, shift)

    # (Mp, Cp) -> slice real rows/channels -> (N, Ho, Wo, C_out) -> NCHW
    # TODO(synk): keep NHWC end-to-end downstream to drop this layout transpose.
    return out[:M, :C_out].reshape(N, Ho, Wo, C_out).transpose(0, 3, 1, 2)


def _reference_forward(x, weight, gamma, beta, *, stride=2, pad=2):
    """Pure-JAX reference: conv -> relu -> training-mode batchnorm (f32)."""
    y = lax.conv_general_dilated(
        x.astype(jnp.float32), weight.astype(jnp.float32),
        window_strides=(stride, stride),
        padding=((pad, pad), (pad, pad)),
        dimension_numbers=("NCHW", "OIHW", "NCHW"),
    )
    y = jnp.maximum(y, 0.0)
    mean = jnp.mean(y, axis=(0, 2, 3), keepdims=True)
    var = jnp.mean((y - mean) ** 2, axis=(0, 2, 3), keepdims=True)
    g = gamma.reshape(1, -1, 1, 1)
    b = beta.reshape(1, -1, 1, 1)
    return g * (y - mean) * lax.rsqrt(var + 1e-5) + b


if __name__ == "__main__":
    key = jax.random.PRNGKey(0)
    k_x, k_w, k_g, k_b = jax.random.split(key, 4)

    N, C_in, H, W = 2, 4, 16, 16
    C_out = 8

    x = jax.random.normal(k_x, (N, C_in, H, W), dtype=jnp.float32)
    weight = 0.1 * jax.random.normal(k_w, (C_out, C_in, 5, 5), dtype=jnp.float32)
    gamma = 1.0 + 0.1 * jax.random.normal(k_g, (C_out,), dtype=jnp.float32)
    beta = 0.1 * jax.random.normal(k_b, (C_out,), dtype=jnp.float32)

    out = encoder_block_forward(x, weight, gamma, beta)
    out = jax.block_until_ready(out)

    ref = _reference_forward(x, weight, gamma, beta)
    assert out.shape == (N, C_out, H // 2, W // 2), out.shape
    # bf16 matmul operands -> loosened tolerance vs the pure-f32 reference.
    assert jnp.allclose(out, ref, atol=3e-2, rtol=3e-2), float(jnp.max(jnp.abs(out - ref)))

    print("KERNEL_OK")
</pallas_src>

<mosaic_0001>
module attributes {stable_mosaic.version = 11 : i64} {
  func.func @_conv_relu_stats_kernel(%arg0: i32, %arg1: memref<128x128xbf16, #tpu.memory_space<vmem>>, %arg2: memref<128x128xbf16, #tpu.memory_space<vmem>>, %arg3: memref<128x128xf32, #tpu.memory_space<vmem>>, %arg4: memref<1x128xf32, #tpu.memory_space<vmem>>, %arg5: memref<1x128xf32, #tpu.memory_space<vmem>>) attributes {dimension_semantics = [#tpu.dimension_semantics<arbitrary>], iteration_bounds = array<i64: 1>, scalar_prefetch = 0 : i64, scratch_operands = 0 : i64, tpu.core_type = #tpu.core_type<tc>, window_params = [{transform_indices = @transform_0, window_bounds = array<i64: 128, 128>}, {pipeline_mode = #tpu.pipeline_mode<synchronous>, transform_indices = @transform_1, window_bounds = array<i64: 128, 128>}, {transform_indices = @transform_2, window_bounds = array<i64: 128, 128>}, {pipeline_mode = #tpu.pipeline_mode<synchronous>, transform_indices = @transform_3, window_bounds = array<i64: 1, 128>}, {pipeline_mode = #tpu.pipeline_mode<synchronous>, transform_indices = @transform_4, window_bounds = array<i64: 1, 128>}]} {
    %c0_i32 = arith.constant 0 : i32
    %0 = arith.cmpi eq, %arg0, %c0_i32 : i32
    %1 = arith.extui %0 : i1 to i32
    %c0_i32_0 = arith.constant 0 : i32
    %2 = arith.cmpi ne, %1, %c0_i32_0 : i32
    scf.if %2 {
      %cst_17 = arith.constant 0.000000e+00 : f32
      %20 = vector.broadcast %cst_17 : f32 to vector<1x128xf32>
      %c0_18 = arith.constant 0 : index
      %c0_19 = arith.constant 0 : index
      %21 = vector.load %arg4[%c0_18, %c0_19] : memref<1x128xf32, #tpu.memory_space<vmem>>, vector<1x128xf32>
      tpu.vector_store %arg4[%c0_18, %c0_19], %20 {strides = array<i32>} : memref<1x128xf32, #tpu.memory_space<vmem>>, vector<1x128xf32>,
      %cst_20 = arith.constant 0.000000e+00 : f32
      %22 = vector.broadcast %cst_20 : f32 to vector<1x128xf32>
      %c0_21 = arith.constant 0 : index
      %c0_22 = arith.constant 0 : index
      %23 = vector.load %arg5[%c0_21, %c0_22] : memref<1x128xf32, #tpu.memory_space<vmem>>, vector<1x128xf32>
      tpu.vector_store %arg5[%c0_21, %c0_22], %22 {strides = array<i32>} : memref<1x128xf32, #tpu.memory_space<vmem>>, vector<1x128xf32>,
    } else {
    }
    %c0 = arith.constant 0 : index
    %c0_1 = arith.constant 0 : index
    %3 = vector.load %arg1[%c0, %c0_1] : memref<128x128xbf16, #tpu.memory_space<vmem>>, vector<128x128xbf16>
    %c0_2 = arith.constant 0 : index
    %c0_3 = arith.constant 0 : index
    %4 = vector.load %arg2[%c0_2, %c0_3] : memref<128x128xbf16, #tpu.memory_space<vmem>>, vector<128x128xbf16>
    %cst = arith.constant dense<0.000000e+00> : vector<128x128xf32>
    %5 = tpu.matmul %3, %4, %cst {dimension_numbers = #tpu.dot_dimension_numbers<[1], [0], [0], [1], [0, 0, 1, 1], [], []>} : vector<128x128xbf16>, vector<128x128xbf16>, vector<128x128xf32> -> vector<128x128xf32>
    %cst_4 = arith.constant 0.000000e+00 : f32
    %6 = vector.broadcast %cst_4 : f32 to vector<128x128xf32>
    %7 = arith.maximumf %5, %6 : vector<128x128xf32>
    %c0_5 = arith.constant 0 : index
    %c0_6 = arith.constant 0 : index
    %8 = vector.load %arg3[%c0_5, %c0_6] : memref<128x128xf32, #tpu.memory_space<vmem>>, vector<128x128xf32>
    tpu.vector_store %arg3[%c0_5, %c0_6], %7 {strides = array<i32>} : memref<128x128xf32, #tpu.memory_space<vmem>>, vector<128x128xf32>,
    %c0_7 = arith.constant 0 : index
    %c0_8 = arith.constant 0 : index
    %9 = vector.load %arg4[%c0_7, %c0_8] : memref<1x128xf32, #tpu.memory_space<vmem>>, vector<1x128xf32>
    %cst_9 = arith.constant dense<0.000000e+00> : vector<128xf32>
    %10 = vector.multi_reduction <add>, %7, %cst_9 [0] : vector<128x128xf32> to vector<128xf32>
    %11 = vector.shape_cast %10 : vector<128xf32> to vector<1x128xf32>
    %12 = arith.addf %9, %11 : vector<1x128xf32>
    %c0_10 = arith.constant 0 : index
    %c0_11 = arith.constant 0 : index
    %13 = vector.load %arg4[%c0_10, %c0_11] : memref<1x128xf32, #tpu.memory_space<vmem>>, vector<1x128xf32>
    tpu.vector_store %arg4[%c0_10, %c0_11], %12 {strides = array<i32>} : memref<1x128xf32, #tpu.memory_space<vmem>>, vector<1x128xf32>,
    %c0_12 = arith.constant 0 : index
    %c0_13 = arith.constant 0 : index
    %14 = vector.load %arg5[%c0_12, %c0_13] : memref<1x128xf32, #tpu.memory_space<vmem>>, vector<1x128xf32>
    %15 = arith.mulf %7, %7 : vector<128x128xf32>
    %cst_14 = arith.constant dense<0.000000e+00> : vector<128xf32>
    %16 = vector.multi_reduction <add>, %15, %cst_14 [0] : vector<128x128xf32> to vector<128xf32>
    %17 = vector.shape_cast %16 : vector<128xf32> to vector<1x128xf32>
    %18 = arith.addf %14, %17 : vector<1x128xf32>
    %c0_15 = arith.constant 0 : index
    %c0_16 = arith.constant 0 : index
    %19 = vector.load %arg5[%c0_15, %c0_16] : memref<1x128xf32, #tpu.memory_space<vmem>>, vector<1x128xf32>
    tpu.vector_store %arg5[%c0_15, %c0_16], %18 {strides = array<i32>} : memref<1x128xf32, #tpu.memory_space<vmem>>, vector<1x128xf32>,
    return
  }
  func.func @transform_0(%arg0: i32) -> (i32, i32) {
    %c0_i32 = arith.constant 0 : i32
    %c0_i32_0 = arith.constant 0 : i32
    return %arg0, %c0_i32 : i32, i32
  }
  func.func @transform_1(%arg0: i32) -> (i32, i32) {
    %c0_i32 = arith.constant 0 : i32
    %c0_i32_0 = arith.constant 0 : i32
    %c0_i32_1 = arith.constant 0 : i32
    return %c0_i32, %c0_i32_0 : i32, i32
  }
  func.func @transform_2(%arg0: i32) -> (i32, i32) {
    %c0_i32 = arith.constant 0 : i32
    %c0_i32_0 = arith.constant 0 : i32
    return %arg0, %c0_i32 : i32, i32
  }
  func.func @transform_3(%arg0: i32) -> (i32, i32) {
    %c0_i32 = arith.constant 0 : i32
    %c0_i32_0 = arith.constant 0 : i32
    %c0_i32_1 = arith.constant 0 : i32
    return %c0_i32, %c0_i32_0 : i32, i32
  }
  func.func @transform_4(%arg0: i32) -> (i32, i32) {
    %c0_i32 = arith.constant 0 : i32
    %c0_i32_0 = arith.constant 0 : i32
    %c0_i32_1 = arith.constant 0 : i32
    return %c0_i32, %c0_i32_0 : i32, i32
  }
}

</mosaic_0001>

<llo_original>
// kernel: tpu_custom_call.1
$region0: #{tpu_custom_call.1}
  #allocation0 [shape = 'u32[]', space=smem, size = 0x4, offset = 0x4, fixed_abs, tag = 'smem constant byte address 0x4 - core index']
  #allocation1 [shape = 'u32[72,128]{1,0:T(1,128)}', space=vmem, size = 0x9000, scoped, tag = 'internal scratch']
  %s0 = inlined_call_operand.hbm [shape: bf16[128,128], index: 0, kind: input, shape index: {}]
  %s1 = inlined_call_operand.hbm [shape: bf16[128,128], index: 1, kind: input, shape index: {}]
  %s2 = inlined_call_operand.hbm [shape: f32[128,128], index: 2, kind: output, shape index: {0}]
  %s3 = inlined_call_operand.hbm [shape: f32[1,128], index: 3, kind: output, shape index: {1}]
  %s4 = inlined_call_operand.hbm [shape: f32[1,128], index: 4, kind: output, shape index: {2}]
  %5 = xla_tuple %s2, %s3, %s4
  %s6 = sld [smem:[#allocation0]]
  $region46: #{tpu_custom_call.1} parent=0
    _
  %s8 = ssub.s32 1, %s6
  %s9 = scalar_select 0, %s8, %s6
  $region1: #{tpu_custom_call.1} parent=0
    #allocation2 [shape = 'u8[32768]{0}', space=vmem, size = 0x8000, scoped, tag = 'input window, operand 0, single buffered']
    #allocation3 [shape = 's32[1]{0}', space=sflag, size = 0x4, scoped, tag = 'scoped memory for tpu_custom_call.1']
    #allocation4 [shape = 's32[1]{0}', space=sflag, size = 0x4, scoped, tag = 'scoped memory for tpu_custom_call.1']
    #allocation5 [shape = 'u8[32768]{0}', space=vmem, size = 0x8000, scoped, tag = 'input window, operand 1, single buffered']
    #allocation6 [shape = 's32[1]{0}', space=sflag, size = 0x4, scoped, tag = 'scoped memory for tpu_custom_call.1']
    #allocation7 [shape = 'u8[65536]{0}', space=vmem, size = 0x10000, scoped, tag = 'output window, operand 0, single buffered']
    #allocation8 [shape = 'u8[512]{0}', space=vmem, size = 0x400, scoped, tag = 'output window, operand 1, single buffered']
    #allocation9 [shape = 's32[1]{0}', space=sflag, size = 0x4, scoped, tag = 'scoped memory for tpu_custom_call.1']
    #allocation10 [shape = 'u8[512]{0}', space=vmem, size = 0x400, scoped, tag = 'output window, operand 2, single buffered']
    %10 = vsyncpa [#allocation3], 0
    %11 = vsyncpa [#allocation6], 0
    %12 = vsyncpa [#allocation4], 0
    %13 = vsyncpa [#allocation9], 0
    // Predicated region
    $region2: #{tpu_custom_call.1} parent=1 // pred_check
      _
    $region3: #{tpu_custom_call.1} parent=1 // pred_check_branch
      %15 = sbr.rel (0) target = $region5
    $region4: #{tpu_custom_call.1} parent=1 // pred_region
      %17 = vsyncadd [#allocation3], 0
      %s18 = sshll.u32 %s0, 4
      %s19 = int_to_ptr.hbm [resolvable:$true] %s18
      %s20 = sshll.u32 [#allocation2], 4
      %s21 = int_to_ptr.vmem [resolvable:$true] %s20
      %26 = dma.hbm_to_vmem [thread:$0]  %s19, 1024, %s21, [#allocation3], 64, 64, 4
    $region5: #{tpu_custom_call.1} parent=1 // pred_fallthru
      _
    // Predicated region
    $region6: #{tpu_custom_call.1} parent=1 // pred_check
      _
    $region7: #{tpu_custom_call.1} parent=1 // pred_check_branch
      %28 = sbr.rel (0) target = $region9
    $region8: #{tpu_custom_call.1} parent=1 // pred_region
      %30 = vsyncadd [#allocation6], 0
      %s31 = sshll.u32 %s1, 4
      %s32 = int_to_ptr.hbm [resolvable:$true] %s31
      %s33 = sshll.u32 [#allocation5], 4
      %s34 = int_to_ptr.vmem [resolvable:$true] %s33
      %39 = dma.hbm_to_vmem [thread:$0]  %s32, 1024, %s34, [#allocation6], 64, 64, 4
    $region9: #{tpu_custom_call.1} parent=1 // pred_fallthru
      _
    // Predicated region
    $region10: #{tpu_custom_call.1} parent=1 // pred_check
      _
    $region11: #{tpu_custom_call.1} parent=1 // pred_check_branch
      %41 = sbr.rel (0) target = $region13
    $region12: #{tpu_custom_call.1} parent=1 // pred_region
      %43 = dma.done [#allocation3], 1024
    $region13: #{tpu_custom_call.1} parent=1 // pred_fallthru
      _
    // Predicated region
    $region14: #{tpu_custom_call.1} parent=1 // pred_check
      _
    $region15: #{tpu_custom_call.1} parent=1 // pred_check_branch
      %45 = sbr.rel (0) target = $region17
    $region16: #{tpu_custom_call.1} parent=1 // pred_region
      %47 = dma.done [#allocation6], 1024
    $region17: #{tpu_custom_call.1} parent=1 // pred_fallthru
      _
    %p48 = scmp.eq.s32.totalorder 0, 0
    // Predicated region
    $region18: #{tpu_custom_call.1} parent=1 // pred_check
      %p49 = pneg %p48
    $region19: #{tpu_custom_call.1} parent=1 // pred_check_branch
      %51 = sbr.rel (%p49) target = $region21
    $region20: #{tpu_custom_call.1} parent=1 // pred_region
      %52 = vst [vmem:[#allocation8] sm:$0x1] 0.0
      %53 = vst [vmem:[#allocation10] sm:$0x1] 0.0
    $region21: #{tpu_custom_call.1} parent=1 // pred_fallthru
      _
    %v54 = vld [vmem:[#allocation2] sm:$0xf]
    %v55 = vld [vmem:[#allocation2 + $0x4] sm:$0xf]
    %v56 = vld [vmem:[#allocation2 + $0x8] sm:$0xf]
    %v57 = vld [vmem:[#allocation2 + $0xc] sm:$0xf]
    %v58 = vld [vmem:[#allocation2 + $0x10] sm:$0xf]
    %v59 = vld [vmem:[#allocation2 + $0x14] sm:$0xf]
    %v60 = vld [vmem:[#allocation2 + $0x18] sm:$0xf]
    %v61 = vld [vmem:[#allocation2 + $0x1c] sm:$0xf]
    %v62 = vld [vmem:[#allocation2 + $0x20] sm:$0xf]
    %v63 = vld [vmem:[#allocation2 + $0x24] sm:$0xf]
    %v64 = vld [vmem:[#allocation2 + $0x28] sm:$0xf]
    %v65 = vld [vmem:[#allocation2 + $0x2c] sm:$0xf]
    %v66 = vld [vmem:[#allocation2 + $0x30] sm:$0xf]
    %v67 = vld [vmem:[#allocation2 + $0x34] sm:$0xf]
    %v68 = vld [vmem:[#allocation2 + $0x38] sm:$0xf]
    %v69 = vld [vmem:[#allocation2 + $0x3c] sm:$0xf]
    %v70 = vld [vmem:[#allocation5] sm:$0xf]
    %v71 = vld [vmem:[#allocation5 + $0x4] sm:$0xf]
    %v72 = vld [vmem:[#allocation5 + $0x8] sm:$0xf]
    %v73 = vld [vmem:[#allocation5 + $0xc] sm:$0xf]
    %v74 = vld [vmem:[#allocation5 + $0x10] sm:$0xf]
    %v75 = vld [vmem:[#allocation5 + $0x14] sm:$0xf]
    %v76 = vld [vmem:[#allocation5 + $0x18] sm:$0xf]
    %v77 = vld [vmem:[#allocation5 + $0x1c] sm:$0xf]
    %v78 = vld [vmem:[#allocation5 + $0x20] sm:$0xf]
    %v79 = vld [vmem:[#allocation5 + $0x24] sm:$0xf]
    %v80 = vld [vmem:[#allocation5 + $0x28] sm:$0xf]
    %v81 = vld [vmem:[#allocation5 + $0x2c] sm:$0xf]
    %v82 = vld [vmem:[#allocation5 + $0x30] sm:$0xf]
    %v83 = vld [vmem:[#allocation5 + $0x34] sm:$0xf]
    %v84 = vld [vmem:[#allocation5 + $0x38] sm:$0xf]
    %v85 = vld [vmem:[#allocation5 + $0x3c] sm:$0xf]
    %v102 = vunpack.c.l.b16 %v54
    %v103 = vunpack.c.l.b16 %v55
    %v104 = vunpack.c.l.b16 %v56
    %v105 = vunpack.c.l.b16 %v57
    %v106 = vunpack.c.l.b16 %v58
    %v107 = vunpack.c.l.b16 %v59
    %v108 = vunpack.c.l.b16 %v60
    %v109 = vunpack.c.l.b16 %v61
    %v110 = vunpack.c.l.b16 %v62
    %v111 = vunpack.c.l.b16 %v63
    %v112 = vunpack.c.l.b16 %v64
    %v113 = vunpack.c.l.b16 %v65
    %v114 = vunpack.c.l.b16 %v66
    %v115 = vunpack.c.l.b16 %v67
    %v116 = vunpack.c.l.b16 %v68
    %v117 = vunpack.c.l.b16 %v69
    %v118 = vpack.c.b16 %v103, %v102
    %v119 = vpack.c.b16 %v105, %v104
    %v120 = vpack.c.b16 %v107, %v106
    %v121 = vpack.c.b16 %v109, %v108
    %v122 = vpack.c.b16 %v111, %v110
    %v123 = vpack.c.b16 %v113, %v112
    %v124 = vpack.c.b16 %v115, %v114
    %v125 = vpack.c.b16 %v117, %v116
    %v150 = vunpack.c.l.b16 %v70
    %v151 = vunpack.c.l.b16 %v71
    %v152 = vunpack.c.l.b16 %v72
    %v153 = vunpack.c.l.b16 %v73
    %v154 = vunpack.c.l.b16 %v74
    %v155 = vunpack.c.l.b16 %v75
    %v156 = vunpack.c.l.b16 %v76
    %v157 = vunpack.c.l.b16 %v77
    %v158 = vunpack.c.l.b16 %v78
    %v159 = vunpack.c.l.b16 %v79
    %v160 = vunpack.c.l.b16 %v80
    %v161 = vunpack.c.l.b16 %v81
    %v162 = vunpack.c.l.b16 %v82
    %v163 = vunpack.c.l.b16 %v83
    %v164 = vunpack.c.l.b16 %v84
    %v165 = vunpack.c.l.b16 %v85
    %v166 = vpack.c.b16 %v151, %v150
    %v167 = vpack.c.b16 %v153, %v152
    %v168 = vpack.c.b16 %v155, %v154
    %v169 = vpack.c.b16 %v157, %v156
    %v170 = vpack.c.b16 %v159, %v158
    %v171 = vpack.c.b16 %v161, %v160
    %v172 = vpack.c.b16 %v163, %v162
    %v173 = vpack.c.b16 %v165, %v164
    %182 = vmatpush.bf16.msra.mxu0 %v173
    %183 = vmatpush.bf16.msra.mxu0 %v172
    %184 = vmatpush.bf16.msra.mxu0 %v171
    %185 = vmatpush.bf16.msra.mxu0 %v170
    %186 = vmatpush.bf16.msra.mxu0 %v169
    %187 = vmatpush.bf16.msra.mxu0 %v168
    %188 = vmatpush.bf16.msra.mxu0 %v167
    %189 = vmatpush.bf16.msra.mxu0 %v166
    %190 = vmatmul.bf16.gmra.mxu0 %v118
    %v191 = vpop.f32.mrf.mxu0
    %v192 = vadd.f32 0.0, %v191
    %v193 = vpop.f32.mrf.mxu0
    %v194 = vadd.f32 0.0, %v193
    %195 = vmatmul.bf16.gmra.mxu0 %v119
    %v196 = vpop.f32.mrf.mxu0
    %v197 = vadd.f32 0.0, %v196
    %v198 = vpop.f32.mrf.mxu0
    %v199 = vadd.f32 0.0, %v198
    %200 = vmatmul.bf16.gmra.mxu0 %v120
    %v201 = vpop.f32.mrf.mxu0
    %v202 = vadd.f32 0.0, %v201
    %v203 = vpop.f32.mrf.mxu0
    %v204 = vadd.f32 0.0, %v203
    %205 = vmatmul.bf16.gmra.mxu0 %v121
    %v206 = vpop.f32.mrf.mxu0
    %v207 = vadd.f32 0.0, %v206
    %v208 = vpop.f32.mrf.mxu0
    %v209 = vadd.f32 0.0, %v208
    %210 = vmatmul.bf16.gmra.mxu0 %v122
    %v211 = vpop.f32.mrf.mxu0
    %v212 = vadd.f32 0.0, %v211
    %v213 = vpop.f32.mrf.mxu0
    %v214 = vadd.f32 0.0, %v213
    %215 = vmatmul.bf16.gmra.mxu0 %v123
    %v216 = vpop.f32.mrf.mxu0
    %v217 = vadd.f32 0.0, %v216
    %v218 = vpop.f32.mrf.mxu0
    %v219 = vadd.f32 0.0, %v218
    %220 = vmatmul.bf16.gmra.mxu0 %v124
    %v221 = vpop.f32.mrf.mxu0
    %v222 = vadd.f32 0.0, %v221
    %v223 = vpop.f32.mrf.mxu0
    %v224 = vadd.f32 0.0, %v223
    %225 = vmatmul.bf16.gmra.mxu0 %v125
    %v226 = vpop.f32.mrf.mxu0
    %v227 = vadd.f32 0.0, %v226
    %v228 = vpop.f32.mrf.mxu0
    %v229 = vadd.f32 0.0, %v228
    %230 = vdwg.mxu0
    %v231 = vmax.f32 %v192, 0.0
    %v232 = vmax.f32 %v194, 0.0
    %v233 = vmax.f32 %v197, 0.0
    %v234 = vmax.f32 %v199, 0.0
    %v235 = vmax.f32 %v202, 0.0
    %v236 = vmax.f32 %v204, 0.0
    %v237 = vmax.f32 %v207, 0.0
    %v238 = vmax.f32 %v209, 0.0
    %v239 = vmax.f32 %v212, 0.0
    %v240 = vmax.f32 %v214, 0.0
    %v241 = vmax.f32 %v217, 0.0
    %v242 = vmax.f32 %v219, 0.0
    %v243 = vmax.f32 %v222, 0.0
    %v244 = vmax.f32 %v224, 0.0
    %v245 = vmax.f32 %v227, 0.0
    %v246 = vmax.f32 %v229, 0.0
    %247 = vst [vmem:[#allocation7] sm:$0xff] %v231
    %248 = vst [vmem:[#allocation7 + $0x8] sm:$0xff] %v232
    %249 = vst [vmem:[#allocation7 + $0x10] sm:$0xff] %v233
    %250 = vst [vmem:[#allocation7 + $0x18] sm:$0xff] %v234
    %251 = vst [vmem:[#allocation7 + $0x20] sm:$0xff] %v235
    %252 = vst [vmem:[#allocation7 + $0x28] sm:$0xff] %v236
    %253 = vst [vmem:[#allocation7 + $0x30] sm:$0xff] %v237
    %254 = vst [vmem:[#allocation7 + $0x38] sm:$0xff] %v238
    %255 = vst [vmem:[#allocation7 + $0x40] sm:$0xff] %v239
    %256 = vst [vmem:[#allocation7 + $0x48] sm:$0xff] %v240
    %257 = vst [vmem:[#allocation7 + $0x50] sm:$0xff] %v241
    %258 = vst [vmem:[#allocation7 + $0x58] sm:$0xff] %v242
    %259 = vst [vmem:[#allocation7 + $0x60] sm:$0xff] %v243
    %260 = vst [vmem:[#allocation7 + $0x68] sm:$0xff] %v244
    %261 = vst [vmem:[#allocation7 + $0x70] sm:$0xff] %v245
    %262 = vst [vmem:[#allocation7 + $0x78] sm:$0xff] %v246
    %v263 = vld [vmem:[#allocation8] sm:$0x1]
    %v264 = vadd.f32 %v231, %v232
    %v265 = vadd.f32 %v264, %v233
    %v266 = vadd.f32 %v265, %v234
    %v267 = vadd.f32 %v266, %v235
    %v268 = vadd.f32 %v267, %v236
    %v269 = vadd.f32 %v268, %v237
    %v270 = vadd.f32 %v269, %v238
    %v271 = vadd.f32 %v270, %v239
    %v272 = vadd.f32 %v271, %v240
    %v273 = vadd.f32 %v272, %v241
    %v274 = vadd.f32 %v273, %v242
    %v275 = vadd.f32 %v274, %v243
    %v276 = vadd.f32 %v275, %v244
    %v277 = vadd.f32 %v276, %v245
    %v278 = vadd.f32 %v277, %v246
    %v279 = vrot.slane %v278, 4
    %v280 = vadd.f32 %v278, %v279
    %v281 = vrot.slane %v280, 2
    %v282 = vadd.f32 %v280, %v281
    %v283 = vrot.slane %v282, 1
    %v284 = vadd.f32 %v282, %v283
    %v285 = vadd.f32 %v263, %v284
    %286 = vst [vmem:[#allocation8] sm:$0x1] %v285
    %v287 = vld [vmem:[#allocation10] sm:$0x1]
    %v288 = vmul.f32 %v231, %v231
    %v289 = vmul.f32 %v232, %v232
    %v290 = vmul.f32 %v233, %v233
    %v291 = vmul.f32 %v234, %v234
    %v292 = vmul.f32 %v235, %v235
    %v293 = vmul.f32 %v236, %v236
    %v294 = vmul.f32 %v237, %v237
    %v295 = vmul.f32 %v238, %v238
    %v296 = vmul.f32 %v239, %v239
    %v297 = vmul.f32 %v240, %v240
    %v298 = vmul.f32 %v241, %v241
    %v299 = vmul.f32 %v242, %v242
    %v300 = vmul.f32 %v243, %v243
    %v301 = vmul.f32 %v244, %v244
    %v302 = vmul.f32 %v245, %v245
    %v303 = vmul.f32 %v246, %v246
    %v304 = vadd.f32 %v288, %v289
    %v305 = vadd.f32 %v304, %v290
    %v306 = vadd.f32 %v305, %v291
    %v307 = vadd.f32 %v306, %v292
    %v308 = vadd.f32 %v307, %v293
    %v309 = vadd.f32 %v308, %v294
    %v310 = vadd.f32 %v309, %v295
    %v311 = vadd.f32 %v310, %v296
    %v312 = vadd.f32 %v311, %v297
    %v313 = vadd.f32 %v312, %v298
    %v314 = vadd.f32 %v313, %v299
    %v315 = vadd.f32 %v314, %v300
    %v316 = vadd.f32 %v315, %v301
    %v317 = vadd.f32 %v316, %v302
    %v318 = vadd.f32 %v317, %v303
    %v319 = vrot.slane %v318, 4
    %v320 = vadd.f32 %v318, %v319
    %v321 = vrot.slane %v320, 2
    %v322 = vadd.f32 %v320, %v321
    %v323 = vrot.slane %v322, 1
    %v324 = vadd.f32 %v322, %v323
    %v325 = vadd.f32 %v287, %v324
    %326 = vst [vmem:[#allocation10] sm:$0x1] %v325
    // Predicated region
    $region22: #{tpu_custom_call.1} parent=1 // pred_check
      _
    $region23: #{tpu_custom_call.1} parent=1 // pred_check_branch
      %328 = sbr.rel (0) target = $region25
    $region24: #{tpu_custom_call.1} parent=1 // pred_region
      %330 = vsyncadd [#allocation4], 0
      %s331 = sshll.u32 [#allocation7], 4
      %s332 = int_to_ptr.vmem [resolvable:$true] %s331
      %s333 = sshll.u32 %s2, 4
      %s334 = int_to_ptr.hbm [resolvable:$true] %s333
      %339 = dma.vmem_to_hbm [thread:$0]  %s332, 2048, %s334, [#allocation4], 128, 128, 8
    $region25: #{tpu_custom_call.1} parent=1 // pred_fallthru
      _
    // Predicated region
    $region26: #{tpu_custom_call.1} parent=1 // pred_check
      _
    $region27: #{tpu_custom_call.1} parent=1 // pred_check_branch
      %341 = sbr.rel (0) target = $region29
    $region28: #{tpu_custom_call.1} parent=1 // pred_region
      %343 = vsyncadd [#allocation9], 0
      %s345 = sshll.u32 [#allocation8], 4
      %s346 = int_to_ptr.vmem [resolvable:$true] %s345
      %s347 = sshll.u32 %s3, 4
      %s348 = int_to_ptr.hbm [resolvable:$true] %s347
      %350 = dma.vmem_to_hbm [thread:$0]  %s346, 16, %s348, [#allocation9]
    $region29: #{tpu_custom_call.1} parent=1 // pred_fallthru
      _
    // Predicated region
    $region30: #{tpu_custom_call.1} parent=1 // pred_check
      _
    $region31: #{tpu_custom_call.1} parent=1 // pred_check_branch
      %352 = sbr.rel (0) target = $region33
    $region32: #{tpu_custom_call.1} parent=1 // pred_region
      %354 = vsyncadd [#allocation9], 0
      %s356 = sshll.u32 [#allocation10], 4
      %s357 = int_to_ptr.vmem [resolvable:$true] %s356
      %s358 = sshll.u32 %s4, 4
      %s359 = int_to_ptr.hbm [resolvable:$true] %s358
      %361 = dma.vmem_to_hbm [thread:$0]  %s357, 16, %s359, [#allocation9]
    $region33: #{tpu_custom_call.1} parent=1 // pred_fallthru
      _
    // Predicated region
    $region34: #{tpu_custom_call.1} parent=1 // pred_check
      _
    $region35: #{tpu_custom_call.1} parent=1 // pred_check_branch
      %363 = sbr.rel (0) target = $region37
    $region36: #{tpu_custom_call.1} parent=1 // pred_region
      %365 = dma.done [#allocation4], 2048
    $region37: #{tpu_custom_call.1} parent=1 // pred_fallthru
      _
    // Predicated region
    $region38: #{tpu_custom_call.1} parent=1 // pred_check
      _
    $region39: #{tpu_custom_call.1} parent=1 // pred_check_branch
      %367 = sbr.rel (0) target = $region41
    $region40: #{tpu_custom_call.1} parent=1 // pred_region
      %369 = dma.done [#allocation9], 16
    $region41: #{tpu_custom_call.1} parent=1 // pred_fallthru
      _
    // Predicated region
    $region42: #{tpu_custom_call.1} parent=1 // pred_check
      _
    $region43: #{tpu_custom_call.1} parent=1 // pred_check_branch
      %371 = sbr.rel (0) target = $region45
    $region44: #{tpu_custom_call.1} parent=1 // pred_region
      %373 = dma.done [#allocation9], 16
    $region45: #{tpu_custom_call.1} parent=1 // pred_fallthru
      _
    %374 = vsyncpa [#allocation3], 1
    %375 = vsyncpa [#allocation6], 1
    %376 = vsyncpa [#allocation4], 1
    %377 = vsyncpa [#allocation9], 1

</llo_original>
